<compile_context>
chip_gen: v6e
topology: v6e:2x2x1
jax: 0.10.0
libtpu: 0.0.40
codegen_flags: <defaults>
</compile_context>

<pallas_src>
import functools

import jax
import jax.numpy as jnp
from jax.experimental import pallas as pl
from jax.experimental.pallas import tpu as pltpu

_MIB = 1024 * 1024


# ----------------------------------------------------------------------------
# Kernel body
# ----------------------------------------------------------------------------
def _rel_head_kernel(code_ref, text_ref, w1c_ref, w1t_ref, w1d_ref, b1_ref,
                     h_ref, code_acc, text_acc, *, inv_seq_len):
    s = pl.program_id(1)

    @pl.when(s == 0)
    def _init():
        code_acc[...] = jnp.zeros_like(code_acc)
        text_acc[...] = jnp.zeros_like(text_acc)

    # Steady state: pure streaming token-sum, accumulated in f32 (inputs may be
    # bf16 or f32; the sublane reduce runs on the XLU/VPU under the DMA).
    code_acc[...] += jnp.sum(code_ref[...], axis=1, dtype=jnp.float32)
    text_acc[...] += jnp.sum(text_ref[...], axis=1, dtype=jnp.float32)

    @pl.when(s == pl.num_programs(1) - 1)
    def _finalize():
        pool_code = code_acc[...] * inv_seq_len
        pool_text = text_acc[...] * inv_seq_len
        diff = jnp.abs(pool_code - pool_text)
        wdt = w1c_ref.dtype
        h = (jnp.dot(pool_code.astype(wdt), w1c_ref[...],
                     preferred_element_type=jnp.float32)
             + jnp.dot(pool_text.astype(wdt), w1t_ref[...],
                       preferred_element_type=jnp.float32)
             + jnp.dot(diff.astype(wdt), w1d_ref[...],
                       preferred_element_type=jnp.float32)
             + b1_ref[...].astype(jnp.float32))
        h_ref[...] = jnp.tanh(h).astype(h_ref.dtype)


# ----------------------------------------------------------------------------
# Block sizing helpers (generation-aware)
# ----------------------------------------------------------------------------
def _pick_block_b(B, *, want_multiple_blocks=True, cap=32):
    """Multiple-of-8 divisor of B (<= cap) if one exists, else the full B.

    Preferring >= 2 batch tiles lets v7x's two TensorCores both stream (batch
    axis is 'parallel'); falling back to full B keeps the (block_b, H) output /
    accumulator block a legal, dense (unmasked-store) layout when B has no
    multiple-of-8 divisor (e.g. B = 2, 6, 12).
    """
    cands = [d for d in range(8, min(B, cap) + 1, 8) if B % d == 0]
    if not cands:
        return B
    if want_multiple_blocks:
        two = [d for d in cands if B // d >= 2]
        if two:
            return max(two)
    return max(cands)


def _block_s_candidates(S, cap=1024):
    """Multiple-of-8 divisors of S (descending, <= cap); full S as fallback."""
    cands = [d for d in range(8, min(S, cap) + 1, 8) if S % d == 0]
    if not cands:
        return [S]  # no multiple-of-8 divisor (odd/prime S): single full tile
    return sorted(cands, reverse=True)


def _vmem_budget_bytes():
    """Usable VMEM budget with headroom: ~48 MiB on v7x, ~112 MiB on v5e/v6e."""
    cap = 64 * _MIB  # conservative (v7x-sized) fallback
    try:
        info = pltpu.get_tpu_info()
        cap = int(getattr(info, "vmem_capacity_bytes", cap))
    except Exception:
        pass
    return max(cap - 16 * _MIB, cap // 2)


def _footprint_bytes(block_b, block_s, H, in_item, w_item, out_item):
    stream = 2 * 2 * block_b * block_s * H * in_item   # 2 inputs x double-buffer
    weights = 3 * H * H * w_item + H * 4               # single-buffered + f32 bias
    out = 2 * block_b * H * out_item                   # output block, 2 buffers
    scratch = 2 * block_b * H * 4                      # f32 accumulators
    return stream + weights + out + scratch


# ----------------------------------------------------------------------------
# Wrapper
# ----------------------------------------------------------------------------
def relation_classify_header(code_hidden, text_hidden, params, *,
                             weight_dtype=None):
    """code_hidden, text_hidden: (B, S, H). Returns logits (B, 2) in f32."""
    B, S, H = code_hidden.shape
    assert text_hidden.shape == (B, S, H)

    in_dtype = code_hidden.dtype
    if weight_dtype is None:
        # bf16 weights when the model runs in bf16 (halves resident footprint
        # and the one-time weight DMA); keep f32 weights for f32 activations so
        # the result matches the f32 reference tightly.
        weight_dtype = jnp.bfloat16 if in_dtype == jnp.bfloat16 \
            else params["dense_w"].dtype

    w1 = params["dense_w"]     # (H, 3H) -- PyTorch Linear layout (out, in)
    b1 = params["dense_b"]     # (H,)
    w2 = params["out_w"]       # (2, H)
    b2 = params["out_b"]       # (2,)

    # Pre-transpose / split the dense weight: x @ W^T with x = [code|text|diff].
    w1_t = jnp.transpose(w1).astype(weight_dtype)   # (3H, H)
    w1c = w1_t[:H, :]
    w1t = w1_t[H:2 * H, :]
    w1d = w1_t[2 * H:, :]
    b1_2d = b1.reshape(1, H).astype(jnp.float32)

    # Kernel output (tanh hidden) dtype: bf16 when activations are bf16 (halves
    # the (B, H) writeback + re-read by the tiny XLA epilogue), else f32.
    h_dtype = jnp.bfloat16 if in_dtype == jnp.bfloat16 else jnp.float32

    # --- block sizing, coupled to the per-generation VMEM budget -------------
    block_b = _pick_block_b(B)
    in_item = jnp.dtype(in_dtype).itemsize
    w_item = jnp.dtype(weight_dtype).itemsize
    out_item = jnp.dtype(h_dtype).itemsize

    budget = _vmem_budget_bytes()
    s_cands = _block_s_candidates(S)
    block_s = s_cands[-1]  # smallest candidate as last resort
    for cand in s_cands:
        if _footprint_bytes(block_b, cand, H, in_item, w_item, out_item) <= budget:
            block_s = cand
            break

    need = _footprint_bytes(block_b, block_s, H, in_item, w_item, out_item)
    vmem_limit = int(min(max(need * 3 // 2, 16 * _MIB), max(budget, need)))

    grid = (B // block_b, S // block_s)
    kernel = functools.partial(_rel_head_kernel, inv_seq_len=1.0 / S)

    h = pl.pallas_call(
        kernel,
        out_shape=jax.ShapeDtypeStruct((B, H), h_dtype),
        grid_spec=pltpu.PrefetchScalarGridSpec(
            num_scalar_prefetch=0,
            grid=grid,
            in_specs=[
                # Streamed hidden states: new tile per (b, s) grid point.
                pl.BlockSpec((block_b, block_s, H), lambda b, s: (b, s, 0)),
                pl.BlockSpec((block_b, block_s, H), lambda b, s: (b, s, 0)),
                # Weights / bias: constant index_map + single buffer ->
                # DMA'd once, VMEM-resident, no double-buffer overhead.
                pl.BlockSpec((H, H), lambda b, s: (0, 0),
                             pipeline_mode=pl.Buffered(1)),
                pl.BlockSpec((H, H), lambda b, s: (0, 0),
                             pipeline_mode=pl.Buffered(1)),
                pl.BlockSpec((H, H), lambda b, s: (0, 0),
                             pipeline_mode=pl.Buffered(1)),
                pl.BlockSpec((1, H), lambda b, s: (0, 0),
                             pipeline_mode=pl.Buffered(1)),
            ],
            # Same output block across the S axis -> resident accumulator tile.
            out_specs=pl.BlockSpec((block_b, H), lambda b, s: (b, 0)),
            scratch_shapes=[
                pltpu.VMEM((block_b, H), jnp.float32),  # code token-sum
                pltpu.VMEM((block_b, H), jnp.float32),  # text token-sum
            ],
        ),
        compiler_params=pltpu.CompilerParams(
            dimension_semantics=("parallel", "arbitrary"),
            vmem_limit_bytes=vmem_limit,
        ),
    )(code_hidden, text_hidden, w1c, w1t, w1d, b1_2d)

    # output_layer: Linear(H -> 2) on the tiny (B, H) tanh output in plain XLA
    # (a lane-2 matmul + masked store inside the kernel is pure overhead).
    logits = (h.astype(jnp.float32) @ jnp.transpose(w2).astype(jnp.float32)
              + b2.astype(jnp.float32))
    return logits


# ----------------------------------------------------------------------------
# Pure-JAX reference
# ----------------------------------------------------------------------------
def _reference(code_hidden, text_hidden, params):
    pool_code = jnp.mean(code_hidden.astype(jnp.float32), axis=1)
    pool_text = jnp.mean(text_hidden.astype(jnp.float32), axis=1)
    diff = jnp.abs(pool_code - pool_text)
    cat = jnp.concatenate([pool_code, pool_text, diff], axis=1)
    x = cat @ params["dense_w"].T + params["dense_b"]
    x = jnp.tanh(x)
    return x @ params["out_w"].T + params["out_b"]


if __name__ == "__main__":
    B, S, H = 2, 8, 32  # batch, seq, hidden_size

    key = jax.random.PRNGKey(0)
    k_code, k_text, k_w1, k_b1, k_w2, k_b2 = jax.random.split(key, 6)

    code_hidden = jax.random.normal(k_code, (B, S, H), dtype=jnp.float32)
    text_hidden = jax.random.normal(k_text, (B, S, H), dtype=jnp.float32)

    # Deterministic synthetic parameters (PyTorch Linear shapes: (out, in)).
    params = {
        "dense_w": jax.random.normal(k_w1, (H, 3 * H), dtype=jnp.float32) * 0.05,
        "dense_b": jax.random.normal(k_b1, (H,), dtype=jnp.float32) * 0.05,
        "out_w": jax.random.normal(k_w2, (2, H), dtype=jnp.float32) * 0.05,
        "out_b": jax.random.normal(k_b2, (2,), dtype=jnp.float32) * 0.05,
    }

    ref = _reference(code_hidden, text_hidden, params)

    # f32 path: exact layout / semantics of the PyTorch module.
    out = relation_classify_header(code_hidden, text_hidden, params)
    out = jax.block_until_ready(out)
    assert out.shape == (B, 2)
    assert jnp.allclose(out, ref, atol=1e-5, rtol=1e-5)

    # bf16 activation + bf16 weight path (the HBM-bandwidth lever); f32
    # accumulation inside the kernel, so only bf16 rounding error remains.
    out_bf16 = relation_classify_header(code_hidden.astype(jnp.bfloat16),
                                        text_hidden.astype(jnp.bfloat16),
                                        params)
    out_bf16 = jax.block_until_ready(out_bf16)
    assert out_bf16.shape == (B, 2)
    assert jnp.allclose(out_bf16, ref, atol=2e-2, rtol=2e-2)

    print("KERNEL_OK")
</pallas_src>

<mosaic_0001>
module attributes {stable_mosaic.version = 11 : i64} {
  func.func @_rel_head_kernel(%arg0: i32, %arg1: i32, %arg2: memref<2x8x32xf32, #tpu.memory_space<vmem>>, %arg3: memref<2x8x32xf32, #tpu.memory_space<vmem>>, %arg4: memref<32x32xf32, #tpu.memory_space<vmem>>, %arg5: memref<32x32xf32, #tpu.memory_space<vmem>>, %arg6: memref<32x32xf32, #tpu.memory_space<vmem>>, %arg7: memref<1x32xf32, #tpu.memory_space<vmem>>, %arg8: memref<2x32xf32, #tpu.memory_space<vmem>>, %arg9: memref<2x32xf32, #tpu.memory_space<vmem>>, %arg10: memref<2x32xf32, #tpu.memory_space<vmem>>) attributes {dimension_semantics = [#tpu.dimension_semantics<parallel>, #tpu.dimension_semantics<arbitrary>], iteration_bounds = array<i64: 1, 1>, scalar_prefetch = 0 : i64, scratch_operands = 2 : i64, tpu.core_type = #tpu.core_type<tc>, window_params = [{transform_indices = @transform_0, window_bounds = array<i64: 2, 8, 32>}, {transform_indices = @transform_1, window_bounds = array<i64: 2, 8, 32>}, {pipeline_mode = #tpu.pipeline_mode<synchronous>, transform_indices = @transform_2, window_bounds = array<i64: 32, 32>}, {pipeline_mode = #tpu.pipeline_mode<synchronous>, transform_indices = @transform_3, window_bounds = array<i64: 32, 32>}, {pipeline_mode = #tpu.pipeline_mode<synchronous>, transform_indices = @transform_4, window_bounds = array<i64: 32, 32>}, {pipeline_mode = #tpu.pipeline_mode<synchronous>, transform_indices = @transform_5, window_bounds = array<i64: 1, 32>}, {transform_indices = @transform_6, window_bounds = array<i64: 2, 32>}]} {
    %c0_i32 = arith.constant 0 : i32
    %0 = arith.cmpi eq, %arg1, %c0_i32 : i32
    %1 = arith.extui %0 : i1 to i32
    %c0_i32_0 = arith.constant 0 : i32
    %2 = arith.cmpi ne, %1, %c0_i32_0 : i32
    scf.if %2 {
      %cst_17 = arith.constant 0.000000e+00 : f32
      %16 = vector.broadcast %cst_17 : f32 to vector<2x32xf32>
      %c0_18 = arith.constant 0 : index
      %c0_19 = arith.constant 0 : index
      %17 = vector.load %arg9[%c0_18, %c0_19] : memref<2x32xf32, #tpu.memory_space<vmem>>, vector<2x32xf32>
      tpu.vector_store %arg9[%c0_18, %c0_19], %16 {strides = array<i32>} : memref<2x32xf32, #tpu.memory_space<vmem>>, vector<2x32xf32>,
      %cst_20 = arith.constant 0.000000e+00 : f32
      %18 = vector.broadcast %cst_20 : f32 to vector<2x32xf32>
      %c0_21 = arith.constant 0 : index
      %c0_22 = arith.constant 0 : index
      %19 = vector.load %arg10[%c0_21, %c0_22] : memref<2x32xf32, #tpu.memory_space<vmem>>, vector<2x32xf32>
      tpu.vector_store %arg10[%c0_21, %c0_22], %18 {strides = array<i32>} : memref<2x32xf32, #tpu.memory_space<vmem>>, vector<2x32xf32>,
    } else {
    }
    %c0 = arith.constant 0 : index
    %c0_1 = arith.constant 0 : index
    %3 = vector.load %arg9[%c0, %c0_1] : memref<2x32xf32, #tpu.memory_space<vmem>>, vector<2x32xf32>
    %c0_2 = arith.constant 0 : index
    %c0_3 = arith.constant 0 : index
    %c0_4 = arith.constant 0 : index
    %4 = vector.load %arg2[%c0_2, %c0_3, %c0_4] : memref<2x8x32xf32, #tpu.memory_space<vmem>>, vector<2x8x32xf32>
    %cst = arith.constant dense<0.000000e+00> : vector<2x32xf32>
    %5 = vector.multi_reduction <add>, %4, %cst [1] : vector<2x8x32xf32> to vector<2x32xf32>
    %6 = arith.addf %3, %5 : vector<2x32xf32>
    %c0_5 = arith.constant 0 : index
    %c0_6 = arith.constant 0 : index
    %7 = vector.load %arg9[%c0_5, %c0_6] : memref<2x32xf32, #tpu.memory_space<vmem>>, vector<2x32xf32>
    tpu.vector_store %arg9[%c0_5, %c0_6], %6 {strides = array<i32>} : memref<2x32xf32, #tpu.memory_space<vmem>>, vector<2x32xf32>,
    %c0_7 = arith.constant 0 : index
    %c0_8 = arith.constant 0 : index
    %8 = vector.load %arg10[%c0_7, %c0_8] : memref<2x32xf32, #tpu.memory_space<vmem>>, vector<2x32xf32>
    %c0_9 = arith.constant 0 : index
    %c0_10 = arith.constant 0 : index
    %c0_11 = arith.constant 0 : index
    %9 = vector.load %arg3[%c0_9, %c0_10, %c0_11] : memref<2x8x32xf32, #tpu.memory_space<vmem>>, vector<2x8x32xf32>
    %cst_12 = arith.constant dense<0.000000e+00> : vector<2x32xf32>
    %10 = vector.multi_reduction <add>, %9, %cst_12 [1] : vector<2x8x32xf32> to vector<2x32xf32>
    %11 = arith.addf %8, %10 : vector<2x32xf32>
    %c0_13 = arith.constant 0 : index
    %c0_14 = arith.constant 0 : index
    %12 = vector.load %arg10[%c0_13, %c0_14] : memref<2x32xf32, #tpu.memory_space<vmem>>, vector<2x32xf32>
    tpu.vector_store %arg10[%c0_13, %c0_14], %11 {strides = array<i32>} : memref<2x32xf32, #tpu.memory_space<vmem>>, vector<2x32xf32>,
    %c0_i32_15 = arith.constant 0 : i32
    %13 = arith.cmpi eq, %arg1, %c0_i32_15 : i32
    %14 = arith.extui %13 : i1 to i32
    %c0_i32_16 = arith.constant 0 : i32
    %15 = arith.cmpi ne, %14, %c0_i32_16 : i32
    scf.if %15 {
      %c0_17 = arith.constant 0 : index
      %c0_18 = arith.constant 0 : index
      %16 = vector.load %arg9[%c0_17, %c0_18] : memref<2x32xf32, #tpu.memory_space<vmem>>, vector<2x32xf32>
      %cst_19 = arith.constant 1.250000e-01 : f32
      %17 = vector.broadcast %cst_19 : f32 to vector<2x32xf32>
      %18 = arith.mulf %16, %17 : vector<2x32xf32>
      %c0_20 = arith.constant 0 : index
      %c0_21 = arith.constant 0 : index
      %19 = vector.load %arg10[%c0_20, %c0_21] : memref<2x32xf32, #tpu.memory_space<vmem>>, vector<2x32xf32>
      %cst_22 = arith.constant 1.250000e-01 : f32
      %20 = vector.broadcast %cst_22 : f32 to vector<2x32xf32>
      %21 = arith.mulf %19, %20 : vector<2x32xf32>
      %22 = arith.subf %18, %21 : vector<2x32xf32>
      %23 = math.absf %22 : vector<2x32xf32>
      %c0_23 = arith.constant 0 : index
      %c0_24 = arith.constant 0 : index
      %24 = vector.load %arg4[%c0_23, %c0_24] : memref<32x32xf32, #tpu.memory_space<vmem>>, vector<32x32xf32>
      %cst_25 = arith.constant dense<0.000000e+00> : vector<2x32xf32>
      %25 = tpu.matmul %18, %24, %cst_25 {dimension_numbers = #tpu.dot_dimension_numbers<[1], [0], [0], [1], [0, 0, 1, 1], [], []>} : vector<2x32xf32>, vector<32x32xf32>, vector<2x32xf32> -> vector<2x32xf32>
      %c0_26 = arith.constant 0 : index
      %c0_27 = arith.constant 0 : index
      %26 = vector.load %arg5[%c0_26, %c0_27] : memref<32x32xf32, #tpu.memory_space<vmem>>, vector<32x32xf32>
      %cst_28 = arith.constant dense<0.000000e+00> : vector<2x32xf32>
      %27 = tpu.matmul %21, %26, %cst_28 {dimension_numbers = #tpu.dot_dimension_numbers<[1], [0], [0], [1], [0, 0, 1, 1], [], []>} : vector<2x32xf32>, vector<32x32xf32>, vector<2x32xf32> -> vector<2x32xf32>
      %28 = arith.addf %25, %27 : vector<2x32xf32>
      %c0_29 = arith.constant 0 : index
      %c0_30 = arith.constant 0 : index
      %29 = vector.load %arg6[%c0_29, %c0_30] : memref<32x32xf32, #tpu.memory_space<vmem>>, vector<32x32xf32>
      %cst_31 = arith.constant dense<0.000000e+00> : vector<2x32xf32>
      %30 = tpu.matmul %23, %29, %cst_31 {dimension_numbers = #tpu.dot_dimension_numbers<[1], [0], [0], [1], [0, 0, 1, 1], [], []>} : vector<2x32xf32>, vector<32x32xf32>, vector<2x32xf32> -> vector<2x32xf32>
      %31 = arith.addf %28, %30 : vector<2x32xf32>
      %c0_32 = arith.constant 0 : index
      %c0_33 = arith.constant 0 : index
      %32 = vector.load %arg7[%c0_32, %c0_33] : memref<1x32xf32, #tpu.memory_space<vmem>>, vector<1x32xf32>
      %33 = vector.broadcast %32 : vector<1x32xf32> to vector<2x32xf32>
      %34 = arith.addf %31, %33 : vector<2x32xf32>
      %35 = math.tanh %34 : vector<2x32xf32>
      %c0_34 = arith.constant 0 : index
      %c0_35 = arith.constant 0 : index
      %36 = vector.load %arg8[%c0_34, %c0_35] : memref<2x32xf32, #tpu.memory_space<vmem>>, vector<2x32xf32>
      tpu.vector_store %arg8[%c0_34, %c0_35], %35 {strides = array<i32>} : memref<2x32xf32, #tpu.memory_space<vmem>>, vector<2x32xf32>,
    } else {
    }
    return
  }
  func.func @transform_0(%arg0: i32, %arg1: i32) -> (i32, i32, i32) {
    %c0_i32 = arith.constant 0 : i32
    %c0_i32_0 = arith.constant 0 : i32
    return %arg0, %arg1, %c0_i32 : i32, i32, i32
  }
  func.func @transform_1(%arg0: i32, %arg1: i32) -> (i32, i32, i32) {
    %c0_i32 = arith.constant 0 : i32
    %c0_i32_0 = arith.constant 0 : i32
    return %arg0, %arg1, %c0_i32 : i32, i32, i32
  }
  func.func @transform_2(%arg0: i32, %arg1: i32) -> (i32, i32) {
    %c0_i32 = arith.constant 0 : i32
    %c0_i32_0 = arith.constant 0 : i32
    %c0_i32_1 = arith.constant 0 : i32
    return %c0_i32, %c0_i32_0 : i32, i32
  }
  func.func @transform_3(%arg0: i32, %arg1: i32) -> (i32, i32) {
    %c0_i32 = arith.constant 0 : i32
    %c0_i32_0 = arith.constant 0 : i32
    %c0_i32_1 = arith.constant 0 : i32
    return %c0_i32, %c0_i32_0 : i32, i32
  }
  func.func @transform_4(%arg0: i32, %arg1: i32) -> (i32, i32) {
    %c0_i32 = arith.constant 0 : i32
    %c0_i32_0 = arith.constant 0 : i32
    %c0_i32_1 = arith.constant 0 : i32
    return %c0_i32, %c0_i32_0 : i32, i32
  }
  func.func @transform_5(%arg0: i32, %arg1: i32) -> (i32, i32) {
    %c0_i32 = arith.constant 0 : i32
    %c0_i32_0 = arith.constant 0 : i32
    %c0_i32_1 = arith.constant 0 : i32
    return %c0_i32, %c0_i32_0 : i32, i32
  }
  func.func @transform_6(%arg0: i32, %arg1: i32) -> (i32, i32) {
    %c0_i32 = arith.constant 0 : i32
    %c0_i32_0 = arith.constant 0 : i32
    return %arg0, %c0_i32 : i32, i32
  }
}

</mosaic_0001>

<llo_original>
// kernel: tpu_custom_call.1
$region0: #{tpu_custom_call.1}
  #allocation0 [shape = 'u32[]', space=smem, size = 0x4, offset = 0x4, fixed_abs, tag = 'smem constant byte address 0x4 - core index']
  #allocation1 [shape = 'u32[144,128]{1,0:T(1,128)}', space=vmem, size = 0x12000, scoped, tag = 'internal scratch']
  #allocation2 [shape = 'f32[2,32]{1,0:T(2,128)}', space=vmem, size = 0x400, scoped, tag = 'scratch operand']
  #allocation3 [shape = 'f32[2,32]{1,0:T(2,128)}', space=vmem, size = 0x400, scoped, tag = 'scratch operand']
  %s0 = inlined_call_operand.hbm [shape: f32[2,8,32], index: 0, kind: input, shape index: {}]
  %s1 = inlined_call_operand.hbm [shape: f32[2,8,32], index: 1, kind: input, shape index: {}]
  %s2 = inlined_call_operand.hbm [shape: f32[32,32], index: 2, kind: input, shape index: {}]
  %s3 = inlined_call_operand.hbm [shape: f32[32,32], index: 3, kind: input, shape index: {}]
  %s4 = inlined_call_operand.hbm [shape: f32[32,32], index: 4, kind: input, shape index: {}]
  %s5 = inlined_call_operand.vmem [shape: f32[1,32], index: 5, kind: input, shape index: {}]
  %s6 = inlined_call_operand.hbm [shape: f32[2,32], index: 6, kind: output, shape index: {}]
  %s7 = sld [smem:[#allocation0]]
  $region62: #{tpu_custom_call.1} parent=0
    _
  %s9 = ssub.s32 1, %s7
  %s10 = scalar_select 0, %s9, %s7
  $region1: #{tpu_custom_call.1} parent=0
    #allocation4 [shape = 'u8[8192]{0}', space=vmem, size = 0x2000, scoped, tag = 'input window, operand 0, single buffered']
    #allocation5 [shape = 's32[1]{0}', space=sflag, size = 0x4, scoped, tag = 'scoped memory for tpu_custom_call.1']
    #allocation6 [shape = 's32[1]{0}', space=sflag, size = 0x4, scoped, tag = 'scoped memory for tpu_custom_call.1']
    #allocation7 [shape = 'u8[8192]{0}', space=vmem, size = 0x2000, scoped, tag = 'input window, operand 1, single buffered']
    #allocation8 [shape = 's32[1]{0}', space=sflag, size = 0x4, scoped, tag = 'scoped memory for tpu_custom_call.1']
    #allocation9 [shape = 'u8[16384]{0}', space=vmem, size = 0x4000, scoped, tag = 'input window, operand 2, single buffered']
    #allocation10 [shape = 'u8[16384]{0}', space=vmem, size = 0x4000, scoped, tag = 'input window, operand 3, single buffered']
    #allocation11 [shape = 's32[1]{0}', space=sflag, size = 0x4, scoped, tag = 'scoped memory for tpu_custom_call.1']
    #allocation12 [shape = 'u8[16384]{0}', space=vmem, size = 0x4000, scoped, tag = 'input window, operand 4, single buffered']
    #allocation13 [shape = 'u8[1024]{0}', space=vmem, size = 0x400, scoped, tag = 'output window, operand 0, single buffered']
    %11 = vsyncpa [#allocation5], 0
    %12 = vsyncpa [#allocation8], 0
    %13 = vsyncpa [#allocation11], 0
    %14 = vsyncpa [#allocation6], 0
    // Predicated region
    $region2: #{tpu_custom_call.1} parent=1 // pred_check
      _
    $region3: #{tpu_custom_call.1} parent=1 // pred_check_branch
      %16 = sbr.rel (0) target = $region5
    $region4: #{tpu_custom_call.1} parent=1 // pred_region
      %s18 = ssub.s32 256, 256
      %19 = vsyncadd [#allocation5], %s18
      %s20 = sshll.u32 [#allocation4], 4
      %s21 = int_to_ptr.vmem [resolvable:$true] %s20
      %26 = dma.hbm_to_vmem [thread:$0]  %s0, 256, %s21, [#allocation5], 128, 128, 8
    $region5: #{tpu_custom_call.1} parent=1 // pred_fallthru
      _
    // Predicated region
    $region6: #{tpu_custom_call.1} parent=1 // pred_check
      _
    $region7: #{tpu_custom_call.1} parent=1 // pred_check_branch
      %28 = sbr.rel (0) target = $region9
    $region8: #{tpu_custom_call.1} parent=1 // pred_region
      %s30 = ssub.s32 256, 256
      %31 = vsyncadd [#allocation8], %s30
      %s32 = sshll.u32 [#allocation7], 4
      %s33 = int_to_ptr.vmem [resolvable:$true] %s32
      %38 = dma.hbm_to_vmem [thread:$0]  %s1, 256, %s33, [#allocation8], 128, 128, 8
    $region9: #{tpu_custom_call.1} parent=1 // pred_fallthru
      _
    // Predicated region
    $region10: #{tpu_custom_call.1} parent=1 // pred_check
      _
    $region11: #{tpu_custom_call.1} parent=1 // pred_check_branch
      %40 = sbr.rel (0) target = $region13
    $region12: #{tpu_custom_call.1} parent=1 // pred_region
      %s42 = ssub.s32 512, 512
      %43 = vsyncadd [#allocation8], %s42
      %s44 = sshll.u32 [#allocation9], 4
      %s45 = int_to_ptr.vmem [resolvable:$true] %s44
      %50 = dma.hbm_to_vmem [thread:$0]  %s2, 512, %s45, [#allocation8], 128, 128, 8
    $region13: #{tpu_custom_call.1} parent=1 // pred_fallthru
      _
    // Predicated region
    $region14: #{tpu_custom_call.1} parent=1 // pred_check
      _
    $region15: #{tpu_custom_call.1} parent=1 // pred_check_branch
      %52 = sbr.rel (0) target = $region17
    $region16: #{tpu_custom_call.1} parent=1 // pred_region
      %s54 = ssub.s32 512, 512
      %55 = vsyncadd [#allocation11], %s54
      %s56 = sshll.u32 [#allocation10], 4
      %s57 = int_to_ptr.vmem [resolvable:$true] %s56
      %62 = dma.hbm_to_vmem [thread:$0]  %s3, 512, %s57, [#allocation11], 128, 128, 8
    $region17: #{tpu_custom_call.1} parent=1 // pred_fallthru
      _
    // Predicated region
    $region18: #{tpu_custom_call.1} parent=1 // pred_check
      _
    $region19: #{tpu_custom_call.1} parent=1 // pred_check_branch
      %64 = sbr.rel (0) target = $region21
    $region20: #{tpu_custom_call.1} parent=1 // pred_region
      %s66 = ssub.s32 512, 512
      %67 = vsyncadd [#allocation11], %s66
      %s68 = sshll.u32 [#allocation12], 4
      %s69 = int_to_ptr.vmem [resolvable:$true] %s68
      %74 = dma.hbm_to_vmem [thread:$0]  %s4, 512, %s69, [#allocation11], 128, 128, 8
    $region21: #{tpu_custom_call.1} parent=1 // pred_fallthru
      _
    // Predicated region
    $region22: #{tpu_custom_call.1} parent=1 // pred_check
      _
    $region23: #{tpu_custom_call.1} parent=1 // pred_check_branch
      %76 = sbr.rel (0) target = $region25
    $region24: #{tpu_custom_call.1} parent=1 // pred_region
      _
    $region25: #{tpu_custom_call.1} parent=1 // pred_fallthru
      _
    // Predicated region
    $region26: #{tpu_custom_call.1} parent=1 // pred_check
      _
    $region27: #{tpu_custom_call.1} parent=1 // pred_check_branch
      %78 = sbr.rel (0) target = $region29
    $region28: #{tpu_custom_call.1} parent=1 // pred_region
      %79 = dma.done [#allocation5], 256
    $region29: #{tpu_custom_call.1} parent=1 // pred_fallthru
      _
    // Predicated region
    $region30: #{tpu_custom_call.1} parent=1 // pred_check
      _
    $region31: #{tpu_custom_call.1} parent=1 // pred_check_branch
      %81 = sbr.rel (0) target = $region33
    $region32: #{tpu_custom_call.1} parent=1 // pred_region
      %82 = dma.done [#allocation8], 256
    $region33: #{tpu_custom_call.1} parent=1 // pred_fallthru
      _
    // Predicated region
    $region34: #{tpu_custom_call.1} parent=1 // pred_check
      _
    $region35: #{tpu_custom_call.1} parent=1 // pred_check_branch
      %84 = sbr.rel (0) target = $region37
    $region36: #{tpu_custom_call.1} parent=1 // pred_region
      %85 = dma.done [#allocation8], 512
    $region37: #{tpu_custom_call.1} parent=1 // pred_fallthru
      _
    // Predicated region
    $region38: #{tpu_custom_call.1} parent=1 // pred_check
      _
    $region39: #{tpu_custom_call.1} parent=1 // pred_check_branch
      %87 = sbr.rel (0) target = $region41
    $region40: #{tpu_custom_call.1} parent=1 // pred_region
      %88 = dma.done [#allocation11], 512
    $region41: #{tpu_custom_call.1} parent=1 // pred_fallthru
      _
    // Predicated region
    $region42: #{tpu_custom_call.1} parent=1 // pred_check
      _
    $region43: #{tpu_custom_call.1} parent=1 // pred_check_branch
      %90 = sbr.rel (0) target = $region45
    $region44: #{tpu_custom_call.1} parent=1 // pred_region
      %91 = dma.done [#allocation11], 512
    $region45: #{tpu_custom_call.1} parent=1 // pred_fallthru
      _
    %p92 = scmp.eq.s32.totalorder 0, 0
    // Predicated region
    $region46: #{tpu_custom_call.1} parent=1 // pred_check
      %p93 = pneg %p92
    $region47: #{tpu_custom_call.1} parent=1 // pred_check_branch
      %95 = sbr.rel (%p93) target = $region49
    $region48: #{tpu_custom_call.1} parent=1 // pred_region
      %vm96 = vcmask 254976
      %97 = vst.msk [vmem:[#allocation2] sm:$0x3] %vm96, 0.0
      %98 = vst.msk [vmem:[#allocation3] sm:$0x3] %vm96, 0.0
    $region49: #{tpu_custom_call.1} parent=1 // pred_fallthru
      _
    %v99 = vld [vmem:[#allocation2] sm:$0x3]
    %v100 = vld [vmem:[#allocation4] sm:$0xff]
    %v101 = vld [vmem:[#allocation4 + $0x8] sm:$0xff]
    %vm102 = vcmask 261120
    %v103 = vsel %vm102, %v100, 0.0
    %v104 = vrot.slane %v103, 4
    %v105 = vadd.f32 %v103, %v104
    %v106 = vrot.slane %v105, 2
    %v107 = vadd.f32 %v105, %v106
    %v108 = vrot.slane %v107, 1
    %v109 = vadd.f32 %v107, %v108
    %v110 = vsel %vm102, %v101, 0.0
    %v111 = vrot.slane %v110, 4
    %v112 = vadd.f32 %v110, %v111
    %v113 = vrot.slane %v112, 2
    %v114 = vadd.f32 %v112, %v113
    %v115 = vrot.slane %v114, 1
    %v116 = vadd.f32 %v114, %v115
    %vm119 = vcmask 1041409
    %v120 = vsel %vm119, %v116, %v109
    %v122 = vadd.f32 %v99, %v120
    %vm123 = vcmask 254976
    %124 = vst.msk [vmem:[#allocation2] sm:$0x3] %vm123, %v122
    %v125 = vld [vmem:[#allocation3] sm:$0x3]
    %v126 = vld [vmem:[#allocation7] sm:$0xff]
    %v127 = vld [vmem:[#allocation7 + $0x8] sm:$0xff]
    %v128 = vsel %vm102, %v126, 0.0
    %v129 = vrot.slane %v128, 4
    %v130 = vadd.f32 %v128, %v129
    %v131 = vrot.slane %v130, 2
    %v132 = vadd.f32 %v130, %v131
    %v133 = vrot.slane %v132, 1
    %v134 = vadd.f32 %v132, %v133
    %v135 = vsel %vm102, %v127, 0.0
    %v136 = vrot.slane %v135, 4
    %v137 = vadd.f32 %v135, %v136
    %v138 = vrot.slane %v137, 2
    %v139 = vadd.f32 %v137, %v138
    %v140 = vrot.slane %v139, 1
    %v141 = vadd.f32 %v139, %v140
    %v144 = vsel %vm119, %v141, %v134
    %v146 = vadd.f32 %v125, %v144
    %147 = vst.msk [vmem:[#allocation3] sm:$0x3] %vm123, %v146
    // Predicated region
    $region50: #{tpu_custom_call.1} parent=1 // pred_check
      %p148 = pneg %p92
    $region51: #{tpu_custom_call.1} parent=1 // pred_check_branch
      %150 = sbr.rel (%p148) target = $region53
    $region52: #{tpu_custom_call.1} parent=1 // pred_region
      %v151 = vld [vmem:[#allocation2] sm:$0x3]
      %v152 = vmul.f32 %v151, 0.125
      %v153 = vld [vmem:[#allocation3] sm:$0x3]
      %v154 = vmul.f32 %v153, 0.125
      %v155 = vsub.f32 %v152, %v154
      %v156 = vand.u32 2147483647, %v155
      %v157 = vld [vmem:[#allocation9] sm:$0xff]
      %v158 = vld [vmem:[#allocation9 + $0x8] sm:$0xff]
      %v159 = vld [vmem:[#allocation9 + $0x10] sm:$0xff]
      %v160 = vld [vmem:[#allocation9 + $0x18] sm:$0xff]
      %v161 = vld [vmem:[#allocation10] sm:$0xff]
      %v162 = vld [vmem:[#allocation10 + $0x8] sm:$0xff]
      %v163 = vld [vmem:[#allocation10 + $0x10] sm:$0xff]
      %v164 = vld [vmem:[#allocation10 + $0x18] sm:$0xff]
      %v166 = vsel %vm102, %v154, 0
      %168 = vmatprep.subr.mxu0 0.0
      %169 = vmatpush1.msra.mxu0 0.0
      %170 = vmatprep.subr.mxu0 0.0
      %171 = vmatpush1.msra.mxu0 0.0
      %172 = vmatprep.subr.mxu0 0.0
      %173 = vmatpush1.msra.mxu0 0.0
      %174 = vmatprep.subr.mxu0 0.0
      %175 = vmatpush1.msra.mxu0 0.0
      %176 = vmatprep.subr.mxu0 0.0
      %177 = vmatpush1.msra.mxu0 0.0
      %178 = vmatprep.subr.mxu0 0.0
      %179 = vmatpush1.msra.mxu0 0.0
      %180 = vmatprep.subr.mxu0 0.0
      %181 = vmatpush1.msra.mxu0 0.0
      %182 = vmatprep.subr.mxu0 0.0
      %183 = vmatpush1.msra.mxu0 0.0
      %184 = vmatprep.subr.mxu0 0.0
      %185 = vmatpush1.msra.mxu0 0.0
      %186 = vmatprep.subr.mxu0 0.0
      %187 = vmatpush1.msra.mxu0 0.0
      %188 = vmatprep.subr.mxu0 0.0
      %189 = vmatpush1.msra.mxu0 0.0
      %190 = vmatprep.subr.mxu0 0.0
      %191 = vmatpush1.msra.mxu0 0.0
      %192 = vmatprep.subr.mxu0 0.0
      %193 = vmatpush1.msra.mxu0 %v164
      %194 = vmatprep.subr.mxu0 0.0
      %195 = vmatpush1.msra.mxu0 %v163
      %196 = vmatprep.subr.mxu0 0.0
      %197 = vmatpush1.msra.mxu0 %v162
      %198 = vmatprep.subr.mxu0 0.0
      %199 = vmatpush1.msra.mxu0 %v161
      %200 = vmatprep.subr.mxu0 0.0
      %201 = vmatpush2.msra.mxu0 0.0
      %202 = vmatprep.subr.mxu0 0.0
      %203 = vmatpush2.msra.mxu0 0.0
      %204 = vmatprep.subr.mxu0 0.0
      %205 = vmatpush2.msra.mxu0 0.0
      %206 = vmatprep.subr.mxu0 0.0
      %207 = vmatpush2.msra.mxu0 0.0
      %208 = vmatprep.subr.mxu0 0.0
      %209 = vmatpush2.msra.mxu0 0.0
      %210 = vmatprep.subr.mxu0 0.0
      %211 = vmatpush2.msra.mxu0 0.0
      %212 = vmatprep.subr.mxu0 0.0
      %213 = vmatpush2.msra.mxu0 0.0
      %214 = vmatprep.subr.mxu0 0.0
      %215 = vmatpush2.msra.mxu0 0.0
      %216 = vmatprep.subr.mxu0 0.0
      %217 = vmatpush2.msra.mxu0 0.0
      %218 = vmatprep.subr.mxu0 0.0
      %219 = vmatpush2.msra.mxu0 0.0
      %220 = vmatprep.subr.mxu0 0.0
      %221 = vmatpush2.msra.mxu0 0.0
      %222 = vmatprep.subr.mxu0 0.0
      %223 = vmatpush2.msra.mxu0 0.0
      %224 = vmatprep.subr.mxu0 0.0
      %225 = vmatpush2.msra.mxu0 0.0
      %226 = vmatprep.subr.mxu0 0.0
      %227 = vmatpush2.msra.mxu0 0.0
      %228 = vmatprep.subr.mxu0 0.0
      %229 = vmatpush2.msra.mxu0 0.0
      %230 = vmatprep.subr.mxu0 0.0
      %231 = vmatpush2.msra.mxu0 0.0
      %232 = vmatprep.mubr.f32.mxu0 0.0
      %233 = vmatmul.mubr.f32.gmra.mxu0 %v166
      %v234 = vpop.f32.mrf.mxu0
      %v235 = vadd.f32 0.0, %v234
      %v236 = vpop.f32.mrf.mxu0
      %237 = vdwg.mxu0
      %v239 = vsel %vm102, %v152, 0
      %241 = vmatprep.subr.mxu0 0.0
      %242 = vmatpush1.msra.mxu0 0.0
      %243 = vmatprep.subr.mxu0 0.0
      %244 = vmatpush1.msra.mxu0 0.0
      %245 = vmatprep.subr.mxu0 0.0
      %246 = vmatpush1.msra.mxu0 0.0
      %247 = vmatprep.subr.mxu0 0.0
      %248 = vmatpush1.msra.mxu0 0.0
      %249 = vmatprep.subr.mxu0 0.0
      %250 = vmatpush1.msra.mxu0 0.0
      %251 = vmatprep.subr.mxu0 0.0
      %252 = vmatpush1.msra.mxu0 0.0
      %253 = vmatprep.subr.mxu0 0.0
      %254 = vmatpush1.msra.mxu0 0.0
      %255 = vmatprep.subr.mxu0 0.0
      %256 = vmatpush1.msra.mxu0 0.0
      %257 = vmatprep.subr.mxu0 0.0
      %258 = vmatpush1.msra.mxu0 0.0
      %259 = vmatprep.subr.mxu0 0.0
      %260 = vmatpush1.msra.mxu0 0.0
      %261 = vmatprep.subr.mxu0 0.0
      %262 = vmatpush1.msra.mxu0 0.0
      %263 = vmatprep.subr.mxu0 0.0
      %264 = vmatpush1.msra.mxu0 0.0
      %265 = vmatprep.subr.mxu0 0.0
      %266 = vmatpush1.msra.mxu0 %v160
      %267 = vmatprep.subr.mxu0 0.0
      %268 = vmatpush1.msra.mxu0 %v159
      %269 = vmatprep.subr.mxu0 0.0
      %270 = vmatpush1.msra.mxu0 %v158
      %271 = vmatprep.subr.mxu0 0.0
      %272 = vmatpush1.msra.mxu0 %v157
      %273 = vmatprep.subr.mxu0 0.0
      %274 = vmatpush2.msra.mxu0 0.0
      %275 = vmatprep.subr.mxu0 0.0
      %276 = vmatpush2.msra.mxu0 0.0
      %277 = vmatprep.subr.mxu0 0.0
      %278 = vmatpush2.msra.mxu0 0.0
      %279 = vmatprep.subr.mxu0 0.0
      %280 = vmatpush2.msra.mxu0 0.0
      %281 = vmatprep.subr.mxu0 0.0
      %282 = vmatpush2.msra.mxu0 0.0
      %283 = vmatprep.subr.mxu0 0.0
      %284 = vmatpush2.msra.mxu0 0.0
      %285 = vmatprep.subr.mxu0 0.0
      %286 = vmatpush2.msra.mxu0 0.0
      %287 = vmatprep.subr.mxu0 0.0
      %288 = vmatpush2.msra.mxu0 0.0
      %289 = vmatprep.subr.mxu0 0.0
      %290 = vmatpush2.msra.mxu0 0.0
      %291 = vmatprep.subr.mxu0 0.0
      %292 = vmatpush2.msra.mxu0 0.0
      %293 = vmatprep.subr.mxu0 0.0
      %294 = vmatpush2.msra.mxu0 0.0
      %295 = vmatprep.subr.mxu0 0.0
      %296 = vmatpush2.msra.mxu0 0.0
      %297 = vmatprep.subr.mxu0 0.0
      %298 = vmatpush2.msra.mxu0 0.0
      %299 = vmatprep.subr.mxu0 0.0
      %300 = vmatpush2.msra.mxu0 0.0
      %301 = vmatprep.subr.mxu0 0.0
      %302 = vmatpush2.msra.mxu0 0.0
      %303 = vmatprep.subr.mxu0 0.0
      %304 = vmatpush2.msra.mxu0 0.0
      %305 = vmatprep.mubr.f32.mxu0 0.0
      %306 = vmatmul.mubr.f32.gmra.mxu0 %v239
      %v307 = vpop.f32.mrf.mxu0
      %v308 = vadd.f32 %v235, %v307
      %v309 = vpop.f32.mrf.mxu0
      %310 = vdwg.mxu0
      %v311 = vld [vmem:[#allocation12] sm:$0xff]
      %v312 = vld [vmem:[#allocation12 + $0x8] sm:$0xff]
      %v313 = vld [vmem:[#allocation12 + $0x10] sm:$0xff]
      %v314 = vld [vmem:[#allocation12 + $0x18] sm:$0xff]
      %v316 = vsel %vm102, %v156, 0
      %318 = vmatprep.subr.mxu0 0.0
      %319 = vmatpush1.msra.mxu0 0.0
      %320 = vmatprep.subr.mxu0 0.0
      %321 = vmatpush1.msra.mxu0 0.0
      %322 = vmatprep.subr.mxu0 0.0
      %323 = vmatpush1.msra.mxu0 0.0
      %324 = vmatprep.subr.mxu0 0.0
      %325 = vmatpush1.msra.mxu0 0.0
      %326 = vmatprep.subr.mxu0 0.0
      %327 = vmatpush1.msra.mxu0 0.0
      %328 = vmatprep.subr.mxu0 0.0
      %329 = vmatpush1.msra.mxu0 0.0
      %330 = vmatprep.subr.mxu0 0.0
      %331 = vmatpush1.msra.mxu0 0.0
      %332 = vmatprep.subr.mxu0 0.0
      %333 = vmatpush1.msra.mxu0 0.0
      %334 = vmatprep.subr.mxu0 0.0
      %335 = vmatpush1.msra.mxu0 0.0
      %336 = vmatprep.subr.mxu0 0.0
      %337 = vmatpush1.msra.mxu0 0.0
      %338 = vmatprep.subr.mxu0 0.0
      %339 = vmatpush1.msra.mxu0 0.0
      %340 = vmatprep.subr.mxu0 0.0
      %341 = vmatpush1.msra.mxu0 0.0
      %342 = vmatprep.subr.mxu0 0.0
      %343 = vmatpush1.msra.mxu0 %v314
      %344 = vmatprep.subr.mxu0 0.0
      %345 = vmatpush1.msra.mxu0 %v313
      %346 = vmatprep.subr.mxu0 0.0
      %347 = vmatpush1.msra.mxu0 %v312
      %348 = vmatprep.subr.mxu0 0.0
      %349 = vmatpush1.msra.mxu0 %v311
      %350 = vmatprep.subr.mxu0 0.0
      %351 = vmatpush2.msra.mxu0 0.0
      %352 = vmatprep.subr.mxu0 0.0
      %353 = vmatpush2.msra.mxu0 0.0
      %354 = vmatprep.subr.mxu0 0.0
      %355 = vmatpush2.msra.mxu0 0.0
      %356 = vmatprep.subr.mxu0 0.0
      %357 = vmatpush2.msra.mxu0 0.0
      %358 = vmatprep.subr.mxu0 0.0
      %359 = vmatpush2.msra.mxu0 0.0
      %360 = vmatprep.subr.mxu0 0.0
      %361 = vmatpush2.msra.mxu0 0.0
      %362 = vmatprep.subr.mxu0 0.0
      %363 = vmatpush2.msra.mxu0 0.0
      %364 = vmatprep.subr.mxu0 0.0
      %365 = vmatpush2.msra.mxu0 0.0
      %366 = vmatprep.subr.mxu0 0.0
      %367 = vmatpush2.msra.mxu0 0.0
      %368 = vmatprep.subr.mxu0 0.0
      %369 = vmatpush2.msra.mxu0 0.0
      %370 = vmatprep.subr.mxu0 0.0
      %371 = vmatpush2.msra.mxu0 0.0
      %372 = vmatprep.subr.mxu0 0.0
      %373 = vmatpush2.msra.mxu0 0.0
      %374 = vmatprep.subr.mxu0 0.0
      %375 = vmatpush2.msra.mxu0 0.0
      %376 = vmatprep.subr.mxu0 0.0
      %377 = vmatpush2.msra.mxu0 0.0
      %378 = vmatprep.subr.mxu0 0.0
      %379 = vmatpush2.msra.mxu0 0.0
      %380 = vmatprep.subr.mxu0 0.0
      %381 = vmatpush2.msra.mxu0 0.0
      %382 = vmatprep.mubr.f32.mxu0 0.0
      %383 = vmatmul.mubr.f32.gmra.mxu0 %v316
      %v384 = vpop.f32.mrf.mxu0
      %v385 = vadd.f32 0.0, %v384
      %v386 = vpop.f32.mrf.mxu0
      %387 = vdwg.mxu0
      %v388 = vadd.f32 %v308, %v385
      %v389 = vld [vmem:[%s5] sm:$0x1]
      %v391 = vlaneseq
      %v392 = vshrl.u32 %v391, 7
      %v393 = vsub.s32 0, %v392
      %v394 = vrot.slane %v389, %v393
      %v396 = vadd.f32 %v388, %v394
      %v397 = vtanh.pop %v396
      %398 = vst.msk [vmem:[#allocation13] sm:$0x3] %vm123, %v397
    $region53: #{tpu_custom_call.1} parent=1 // pred_fallthru
      _
    // Predicated region
    $region54: #{tpu_custom_call.1} parent=1 // pred_check
      _
    $region55: #{tpu_custom_call.1} parent=1 // pred_check_branch
      %400 = sbr.rel (0) target = $region57
    $region56: #{tpu_custom_call.1} parent=1 // pred_region
      %s402 = ssub.s32 32, 32
      %403 = vsyncadd [#allocation6], %s402
      %s405 = sshll.u32 [#allocation13], 4
      %s406 = int_to_ptr.vmem [resolvable:$true] %s405
      %408 = dma.vmem_to_hbm [thread:$0]  %s406, 32, %s6, [#allocation6]
    $region57: #{tpu_custom_call.1} parent=1 // pred_fallthru
      _
    // Predicated region
    $region58: #{tpu_custom_call.1} parent=1 // pred_check
      _
    $region59: #{tpu_custom_call.1} parent=1 // pred_check_branch
      %410 = sbr.rel (0) target = $region61
    $region60: #{tpu_custom_call.1} parent=1 // pred_region
      %411 = dma.done [#allocation6], 32
    $region61: #{tpu_custom_call.1} parent=1 // pred_fallthru
      _
    %412 = vsyncpa [#allocation5], 1
    %413 = vsyncpa [#allocation8], 1
    %414 = vsyncpa [#allocation11], 1
    %415 = vsyncpa [#allocation6], 1

</llo_original>
